<compile_context>
chip_gen: v6e
topology: v6e:2x2x1
jax: 0.10.0
libtpu: 0.0.40
codegen_flags: <defaults>
</compile_context>

<pallas_src>
import functools

import jax
import jax.numpy as jnp
from jax.experimental import pallas as pl
from jax.experimental.pallas import tpu as pltpu

HIDDEN = 128  # per-head hidden width (matches nn.Linear(state_dim, 128))


def _round_up(n, m):
    return ((n + m - 1) // m) * m


def _cdiv(a, b):
    return -(-a // b)


def _choose_tiling(batch, tile_cap):
    """Return (tile_b, padded_batch, num_grid_steps).

    * rows padded to a multiple of 16 (bf16 sublane packing),
    * per-step tile capped at `tile_cap` rows (VMEM headroom, esp. v7x 64 MiB),
    * >= 2 grid steps once the batch is big enough (keeps both v7x TCs busy),
    * tile sized so the padded batch divides evenly (no wasted padded tiles).
    """
    padded = _round_up(max(batch, 1), 16)
    n = _cdiv(padded, tile_cap)
    if padded >= 1024:
        n = max(n, 2)
    tb = _round_up(_cdiv(padded, n), 16)
    return tb, n * tb, n


def _ppo_kernel(x_ref, p1_ref, p2_ref, probs_ref, value_ref, *,
                hidden2, action_dim):
    # x_ref : (TB, S+1)  bf16, trailing ones column (layer-1 bias folded in)
    # p1_ref: (S+1, 2H)  bf16, [w1_actor || w1_critic ; b1_actor || b1_critic]
    # p2_ref: (2H+1, W)  bf16, block-diagonal layer-2 weights + bias row
    x = x_ref[...]
    p1 = p1_ref[...]

    # ----- fused layer 1 (actor || critic), bias folded, f32 accumulation -----
    h = jnp.dot(x, p1, preferred_element_type=jnp.float32)    # (TB, 2H) f32
    h = jnp.maximum(h, 0.0)                                    # ReLU

    # ----- fused layer 2: lanes [0:A] actor logits, lane A critic value ------
    p2 = p2_ref[...]
    w2 = p2[:hidden2, :]
    b2 = p2[hidden2:hidden2 + 1, :].astype(jnp.float32)
    fused = jnp.dot(h.astype(p2.dtype), w2,
                    preferred_element_type=jnp.float32) + b2   # (TB, W) f32

    # ----- masked softmax over the real action lanes (exact normalization) ---
    lane = jax.lax.broadcasted_iota(jnp.int32, fused.shape, 1)
    act_mask = lane < action_dim
    logits = jnp.where(act_mask, fused, -jnp.inf)
    m = jnp.max(logits, axis=-1, keepdims=True)
    e = jnp.exp(logits - m)                    # pad lanes -> exp(-inf) = 0
    probs = e / jnp.sum(e, axis=-1, keepdims=True)

    probs_ref[...] = probs[:, :action_dim]
    value_ref[...] = fused[:, action_dim:action_dim + 1]


def ppo_actor_critic_forward(x, params, *, tile_cap=2048,
                             compute_dtype=jnp.bfloat16):
    """PPOActorCritic forward in one Pallas kernel.

    x: (batch, state_dim) float32
    params: dict with w1a (S,128), b1a (1,128), w2a (128,A), b2a (1,A),
                      w1c (S,128), b1c (1,128), w2c (128,1), b2c (1,1)
    Returns (action_probs (batch, A) f32, state_value (batch, 1) f32).
    """
    batch, state_dim = x.shape
    hidden = params["w1a"].shape[1]
    action_dim = params["w2a"].shape[1]
    hidden2 = 2 * hidden
    out_w = _round_up(action_dim + 1, 8)       # fused layer-2 output width

    # --- slab 1: [w1a || w1c ; b1a || b1c] -> (S+1, 2H), bias row folded ---
    w1 = jnp.concatenate([params["w1a"], params["w1c"]], axis=1)
    b1 = jnp.concatenate([params["b1a"], params["b1c"]], axis=1)
    slab1 = jnp.concatenate([w1, b1], axis=0).astype(compute_dtype)

    # --- slab 2: block-diagonal layer-2 weights + bias row -> (2H+1, out_w) ---
    w2 = jnp.zeros((hidden2, out_w), jnp.float32)
    w2 = w2.at[:hidden, :action_dim].set(params["w2a"])
    w2 = w2.at[hidden:, action_dim:action_dim + 1].set(params["w2c"])
    b2 = jnp.zeros((1, out_w), jnp.float32)
    b2 = b2.at[0, :action_dim].set(params["b2a"][0])
    b2 = b2.at[0, action_dim].set(params["b2c"][0, 0])
    slab2 = jnp.concatenate([w2, b2], axis=0).astype(compute_dtype)

    # --- batch tiling: pad rows, append ones column (layer-1 bias fold) ---
    tb, padded, n_steps = _choose_tiling(batch, tile_cap)
    x32 = x.astype(jnp.float32)
    if padded != batch:
        x32 = jnp.pad(x32, ((0, padded - batch), (0, 0)))
    x_aug = jnp.concatenate([x32, jnp.ones((padded, 1), jnp.float32)], axis=1)
    x_aug = x_aug.astype(compute_dtype)        # (padded, S+1) bf16

    kernel = functools.partial(_ppo_kernel, hidden2=hidden2,
                               action_dim=action_dim)

    probs, value = pl.pallas_call(
        kernel,
        out_shape=(jax.ShapeDtypeStruct((padded, action_dim), jnp.float32),
                   jax.ShapeDtypeStruct((padded, 1), jnp.float32)),
        grid=(n_steps,),
        in_specs=[
            pl.BlockSpec((tb, state_dim + 1), lambda i: (i, 0)),          # x tile
            pl.BlockSpec((state_dim + 1, hidden2), lambda i: (0, 0)),     # slab1 (resident)
            pl.BlockSpec((hidden2 + 1, out_w), lambda i: (0, 0)),         # slab2 (resident)
        ],
        out_specs=(pl.BlockSpec((tb, action_dim), lambda i: (i, 0)),
                   pl.BlockSpec((tb, 1), lambda i: (i, 0))),
        compiler_params=pltpu.CompilerParams(
            dimension_semantics=("parallel",)),                            # 2 TCs on v7x
    )(x_aug, slab1, slab2)

    if padded != batch:
        probs = probs[:batch]
        value = value[:batch]
    return probs, value


def init_params(key, state_dim, action_dim, hidden=HIDDEN):
    """Deterministic synthetic parameters (PyTorch Linear init, stored (in,out))."""
    ks = jax.random.split(key, 8)

    def lin(kw, kb, fan_in, fan_out):
        bound = 1.0 / jnp.sqrt(fan_in)
        w = jax.random.uniform(kw, (fan_in, fan_out), jnp.float32, -bound, bound)
        b = jax.random.uniform(kb, (1, fan_out), jnp.float32, -bound, bound)
        return w, b

    w1a, b1a = lin(ks[0], ks[1], state_dim, hidden)
    w2a, b2a = lin(ks[2], ks[3], hidden, action_dim)
    w1c, b1c = lin(ks[4], ks[5], state_dim, hidden)
    w2c, b2c = lin(ks[6], ks[7], hidden, 1)
    return dict(w1a=w1a, b1a=b1a, w2a=w2a, b2a=b2a,
                w1c=w1c, b1c=b1c, w2c=w2c, b2c=b2c)


def reference_forward(x, p):
    """Exact f32 semantics of the PyTorch module."""
    h_a = jnp.maximum(x @ p["w1a"] + p["b1a"], 0.0)
    probs = jax.nn.softmax(h_a @ p["w2a"] + p["b2a"], axis=-1)
    h_c = jnp.maximum(x @ p["w1c"] + p["b1c"], 0.0)
    value = h_c @ p["w2c"] + p["b2c"]
    return probs, value


def reference_forward_emulated(x, p, compute_dtype=jnp.bfloat16):
    """Same math with the kernel's bf16-input / f32-accumulate numerics."""
    def q(a):
        return a.astype(compute_dtype).astype(jnp.float32)

    xq = q(x)
    h_a = jnp.maximum(xq @ q(p["w1a"]) + q(p["b1a"]), 0.0)
    probs = jax.nn.softmax(q(h_a) @ q(p["w2a"]) + q(p["b2a"]), axis=-1)
    h_c = jnp.maximum(xq @ q(p["w1c"]) + q(p["b1c"]), 0.0)
    value = q(h_c) @ q(p["w2c"]) + q(p["b2c"])
    return probs, value


if __name__ == "__main__":
    key = jax.random.PRNGKey(0)
    k_p, k_x1, k_x2 = jax.random.split(key, 3)

    state_dim, action_dim = 16, 4
    params = init_params(k_p, state_dim, action_dim)

    # small batch (single tile) and a larger non-multiple batch (padding path)
    for batch, kx in ((8, k_x1), (300, k_x2)):
        x = jax.random.normal(kx, (batch, state_dim), jnp.float32)

        probs, value = ppo_actor_critic_forward(x, params)
        probs = jax.block_until_ready(probs)
        value = jax.block_until_ready(value)

        assert probs.shape == (batch, action_dim)
        assert value.shape == (batch, 1)

        # tight check vs. a reference using the same bf16-in / f32-accum numerics
        ep, ev = reference_forward_emulated(x, params)
        assert jnp.allclose(probs, ep, atol=2e-4, rtol=2e-4)
        assert jnp.allclose(value, ev, atol=2e-4, rtol=2e-4)

        # loose check vs. exact f32 PyTorch-semantics reference (bf16 input cast)
        rp, rv = reference_forward(x, params)
        assert jnp.allclose(probs, rp, atol=3e-2, rtol=3e-2)
        assert jnp.allclose(value, rv, atol=5e-2, rtol=5e-2)

        # exact-division softmax -> tight normalization
        assert jnp.allclose(jnp.sum(probs, axis=-1), 1.0, atol=1e-5)

    print("KERNEL_OK")
</pallas_src>

<mosaic_0001>
module attributes {stable_mosaic.version = 11 : i64} {
  func.func @_ppo_kernel(%arg0: i32, %arg1: memref<16x17xbf16, #tpu.memory_space<vmem>>, %arg2: memref<17x256xbf16, #tpu.memory_space<vmem>>, %arg3: memref<257x8xbf16, #tpu.memory_space<vmem>>, %arg4: memref<16x4xf32, #tpu.memory_space<vmem>>, %arg5: memref<16x1xf32, #tpu.memory_space<vmem>>) attributes {dimension_semantics = [#tpu.dimension_semantics<parallel>], iteration_bounds = array<i64: 1>, scalar_prefetch = 0 : i64, scratch_operands = 0 : i64, tpu.core_type = #tpu.core_type<tc>, window_params = [{transform_indices = @transform_0, window_bounds = array<i64: 16, 17>}, {pipeline_mode = #tpu.pipeline_mode<synchronous>, transform_indices = @transform_1, window_bounds = array<i64: 17, 256>}, {pipeline_mode = #tpu.pipeline_mode<synchronous>, transform_indices = @transform_2, window_bounds = array<i64: 257, 8>}, {transform_indices = @transform_3, window_bounds = array<i64: 16, 4>}, {transform_indices = @transform_4, window_bounds = array<i64: 16, 1>}]} {
    %c0 = arith.constant 0 : index
    %c0_0 = arith.constant 0 : index
    %0 = vector.load %arg1[%c0, %c0_0] : memref<16x17xbf16, #tpu.memory_space<vmem>>, vector<16x17xbf16>
    %c0_1 = arith.constant 0 : index
    %c0_2 = arith.constant 0 : index
    %1 = vector.load %arg2[%c0_1, %c0_2] : memref<17x256xbf16, #tpu.memory_space<vmem>>, vector<17x256xbf16>
    %cst = arith.constant dense<0.000000e+00> : vector<16x256xf32>
    %2 = tpu.matmul %0, %1, %cst {dimension_numbers = #tpu.dot_dimension_numbers<[1], [0], [0], [1], [0, 0, 1, 1], [], []>} : vector<16x17xbf16>, vector<17x256xbf16>, vector<16x256xf32> -> vector<16x256xf32>
    %cst_3 = arith.constant 0.000000e+00 : f32
    %3 = vector.broadcast %cst_3 : f32 to vector<16x256xf32>
    %4 = arith.maximumf %2, %3 : vector<16x256xf32>
    %c0_4 = arith.constant 0 : index
    %c0_5 = arith.constant 0 : index
    %5 = vector.load %arg3[%c0_4, %c0_5] : memref<257x8xbf16, #tpu.memory_space<vmem>>, vector<257x8xbf16>
    %6 = vector.extract_strided_slice %5 {offsets = [0, 0], sizes = [256, 8], strides = [1, 1]} : vector<257x8xbf16> to vector<256x8xbf16>
    %7 = vector.extract_strided_slice %5 {offsets = [256, 0], sizes = [1, 8], strides = [1, 1]} : vector<257x8xbf16> to vector<1x8xbf16>
    %8 = arith.extf %7 : vector<1x8xbf16> to vector<1x8xf32>
    %9 = arith.truncf %4 : vector<16x256xf32> to vector<16x256xbf16>
    %cst_6 = arith.constant dense<0.000000e+00> : vector<16x8xf32>
    %10 = tpu.matmul %9, %6, %cst_6 {dimension_numbers = #tpu.dot_dimension_numbers<[1], [0], [0], [1], [0, 0, 1, 1], [], []>} : vector<16x256xbf16>, vector<256x8xbf16>, vector<16x8xf32> -> vector<16x8xf32>
    %11 = vector.broadcast %8 : vector<1x8xf32> to vector<16x8xf32>
    %12 = arith.addf %10, %11 : vector<16x8xf32>
    %13 = tpu.iota {dimensions = array<i32: 1>} : vector<16x8xi32>
    %c4_i32 = arith.constant 4 : i32
    %14 = vector.broadcast %c4_i32 : i32 to vector<16x8xi32>
    %15 = arith.cmpi slt, %13, %14 : vector<16x8xi32>
    %cst_7 = arith.constant 0xFF800000 : f32
    %16 = vector.broadcast %cst_7 : f32 to vector<16x8xf32>
    %17 = arith.select %15, %12, %16 : vector<16x8xi1>, vector<16x8xf32>
    %cst_8 = arith.constant dense<0xFF800000> : vector<16xf32>
    %18 = vector.multi_reduction <maximumf>, %17, %cst_8 [1] : vector<16x8xf32> to vector<16xf32>
    %19 = vector.shape_cast %18 : vector<16xf32> to vector<16x1xf32>
    %20 = vector.broadcast %19 : vector<16x1xf32> to vector<16x8xf32>
    %21 = arith.subf %17, %20 : vector<16x8xf32>
    %22 = math.exp %21 : vector<16x8xf32>
    %cst_9 = arith.constant dense<0.000000e+00> : vector<16xf32>
    %23 = vector.multi_reduction <add>, %22, %cst_9 [1] : vector<16x8xf32> to vector<16xf32>
    %24 = vector.shape_cast %23 : vector<16xf32> to vector<16x1xf32>
    %25 = vector.broadcast %24 : vector<16x1xf32> to vector<16x8xf32>
    %26 = arith.divf %22, %25 : vector<16x8xf32>
    %27 = vector.extract_strided_slice %26 {offsets = [0, 0], sizes = [16, 4], strides = [1, 1]} : vector<16x8xf32> to vector<16x4xf32>
    %c0_10 = arith.constant 0 : index
    %c0_11 = arith.constant 0 : index
    %28 = vector.load %arg4[%c0_10, %c0_11] : memref<16x4xf32, #tpu.memory_space<vmem>>, vector<16x4xf32>
    tpu.vector_store %arg4[%c0_10, %c0_11], %27 {strides = array<i32>} : memref<16x4xf32, #tpu.memory_space<vmem>>, vector<16x4xf32>,
    %29 = vector.extract_strided_slice %12 {offsets = [0, 4], sizes = [16, 1], strides = [1, 1]} : vector<16x8xf32> to vector<16x1xf32>
    %c0_12 = arith.constant 0 : index
    %c0_13 = arith.constant 0 : index
    %30 = vector.load %arg5[%c0_12, %c0_13] : memref<16x1xf32, #tpu.memory_space<vmem>>, vector<16x1xf32>
    tpu.vector_store %arg5[%c0_12, %c0_13], %29 {strides = array<i32>} : memref<16x1xf32, #tpu.memory_space<vmem>>, vector<16x1xf32>,
    return
  }
  func.func @transform_0(%arg0: i32) -> (i32, i32) {
    %c0_i32 = arith.constant 0 : i32
    %c0_i32_0 = arith.constant 0 : i32
    return %arg0, %c0_i32 : i32, i32
  }
  func.func @transform_1(%arg0: i32) -> (i32, i32) {
    %c0_i32 = arith.constant 0 : i32
    %c0_i32_0 = arith.constant 0 : i32
    %c0_i32_1 = arith.constant 0 : i32
    return %c0_i32, %c0_i32_0 : i32, i32
  }
  func.func @transform_2(%arg0: i32) -> (i32, i32) {
    %c0_i32 = arith.constant 0 : i32
    %c0_i32_0 = arith.constant 0 : i32
    %c0_i32_1 = arith.constant 0 : i32
    return %c0_i32, %c0_i32_0 : i32, i32
  }
  func.func @transform_3(%arg0: i32) -> (i32, i32) {
    %c0_i32 = arith.constant 0 : i32
    %c0_i32_0 = arith.constant 0 : i32
    return %arg0, %c0_i32 : i32, i32
  }
  func.func @transform_4(%arg0: i32) -> (i32, i32) {
    %c0_i32 = arith.constant 0 : i32
    %c0_i32_0 = arith.constant 0 : i32
    return %arg0, %c0_i32 : i32, i32
  }
}

</mosaic_0001>

<llo_original>
// kernel: tpu_custom_call.1
$region0: #{tpu_custom_call.1}
  #allocation0 [shape = 'u32[]', space=smem, size = 0x4, offset = 0x4, fixed_abs, tag = 'smem constant byte address 0x4 - core index']
  #allocation1 [shape = 'u32[144,128]{1,0:T(1,128)}', space=vmem, size = 0x12000, scoped, tag = 'internal scratch']
  %s0 = inlined_call_operand.vmem [shape: bf16[16,17], index: 0, kind: input, shape index: {}]
  %s1 = inlined_call_operand.vmem [shape: bf16[17,256], index: 1, kind: input, shape index: {}]
  %s2 = inlined_call_operand.vmem [shape: bf16[257,8], index: 2, kind: input, shape index: {}]
  %s3 = inlined_call_operand.vmem [shape: f32[16,4], index: 3, kind: output, shape index: {0}]
  %s4 = inlined_call_operand.vmem [shape: f32[16,1], index: 4, kind: output, shape index: {1}]
  %5 = xla_tuple %s3, %s4
  %s6 = sld [smem:[#allocation0]]
  $region30: #{tpu_custom_call.1} parent=0
    _
  %s8 = ssub.s32 1, %s6
  %s9 = scalar_select 0, %s8, %s6
  // Predicated region
  $region2: #{tpu_custom_call.1} parent=0 // pred_check
    _
  $region3: #{tpu_custom_call.1} parent=0 // pred_check_branch
    %11 = sbr.rel (0) target = $region5
  $region4: #{tpu_custom_call.1} parent=0 // pred_region
    _
  $region5: #{tpu_custom_call.1} parent=0 // pred_fallthru
    _
  // Predicated region
  $region6: #{tpu_custom_call.1} parent=0 // pred_check
    _
  $region7: #{tpu_custom_call.1} parent=0 // pred_check_branch
    %13 = sbr.rel (0) target = $region9
  $region8: #{tpu_custom_call.1} parent=0 // pred_region
    _
  $region9: #{tpu_custom_call.1} parent=0 // pred_fallthru
    _
  // Predicated region
  $region10: #{tpu_custom_call.1} parent=0 // pred_check
    _
  $region11: #{tpu_custom_call.1} parent=0 // pred_check_branch
    %15 = sbr.rel (0) target = $region13
  $region12: #{tpu_custom_call.1} parent=0 // pred_region
    _
  $region13: #{tpu_custom_call.1} parent=0 // pred_fallthru
    _
  %v17 = vld [vmem:[%s0] sm:$0xf]
  %v18 = vld [vmem:[%s0 + $0x4] sm:$0xf]
  %v19 = vld [vmem:[%s1] sm:$0xff]
  %v20 = vld [vmem:[%s1 + $0x8] sm:$0xff]
  %v21 = vld [vmem:[%s1 + $0x10] sm:$0x11]
  %v24 = vunpack.c.l.b16 %v17
  %v25 = vunpack.c.l.b16 %v18
  %v26 = vpack.c.b16 %v25, %v24
  %v30 = vunpack.c.l.b16 %v19
  %v31 = vunpack.c.h.b16 %v19
  %v32 = vunpack.c.l.b16 %v20
  %v33 = vunpack.c.h.b16 %v20
  %v34 = vunpack.c.l.b16 %v21
  %v35 = vunpack.c.h.b16 %v21
  %v36 = vpack.c.b16 %v32, %v30
  %v37 = vpack.c.b16 %v33, %v31
  %v38 = vpack.c.b16 %v34, %v34
  %v39 = vpack.c.b16 %v35, %v35
  %vm42 = vcmask 138240
  %v44 = vsel %vm42, %v26, 0
  %vm46 = vcmask 1040384
  %v47 = vsel 0, 4294967295, 65535
  %v48 = vsel %vm46, %v47, 0
  %v50 = vand.u32 %v38, %v48
  %v53 = vand.u32 %v39, %v48
  %55 = vmatprep.subr.bf16.mxu0 0
  %56 = vmatpush1.bf16.msra.mxu0 0
  %57 = vmatprep.subr.bf16.mxu0 0
  %58 = vmatpush1.bf16.msra.mxu0 0
  %59 = vmatprep.subr.bf16.mxu0 0
  %60 = vmatpush1.bf16.msra.mxu0 0
  %61 = vmatprep.subr.bf16.mxu0 0
  %62 = vmatpush1.bf16.msra.mxu0 0
  %63 = vmatprep.subr.bf16.mxu0 0
  %64 = vmatpush1.bf16.msra.mxu0 0
  %65 = vmatprep.subr.bf16.mxu0 0
  %66 = vmatpush1.bf16.msra.mxu0 0
  %67 = vmatprep.subr.bf16.mxu0 %v53
  %68 = vmatpush1.bf16.msra.mxu0 %v50
  %69 = vmatprep.subr.bf16.mxu0 %v37
  %70 = vmatpush1.bf16.msra.mxu0 %v36
  %71 = vmatprep.subr.bf16.mxu0 0
  %72 = vmatpush2.bf16.msra.mxu0 0
  %73 = vmatprep.subr.bf16.mxu0 0
  %74 = vmatpush2.bf16.msra.mxu0 0
  %75 = vmatprep.subr.bf16.mxu0 0
  %76 = vmatpush2.bf16.msra.mxu0 0
  %77 = vmatprep.subr.bf16.mxu0 0
  %78 = vmatpush2.bf16.msra.mxu0 0
  %79 = vmatprep.subr.bf16.mxu0 0
  %80 = vmatpush2.bf16.msra.mxu0 0
  %81 = vmatprep.subr.bf16.mxu0 0
  %82 = vmatpush2.bf16.msra.mxu0 0
  %83 = vmatprep.subr.bf16.mxu0 0
  %84 = vmatpush2.bf16.msra.mxu0 0
  %85 = vmatprep.subr.bf16.mxu0 0
  %86 = vmatpush2.bf16.msra.mxu0 0
  %87 = vmatprep.mubr.bf16.mxu0 0
  %88 = vmatmul.mubr.bf16.gmra.mxu0 %v44
  %v89 = vpop.f32.mrf.mxu0
  %v90 = vadd.f32 0.0, %v89
  %v91 = vpop.f32.mrf.mxu0
  %v92 = vadd.f32 0.0, %v91
  %v93 = vpop.f32.mrf.mxu0
  %v94 = vadd.f32 0.0, %v93
  %v95 = vpop.f32.mrf.mxu0
  %v96 = vadd.f32 0.0, %v95
  %97 = vdwg.mxu0
  %v98 = vmax.f32 %v90, 0.0
  %v99 = vmax.f32 %v92, 0.0
  %v100 = vmax.f32 %v94, 0.0
  %v101 = vmax.f32 %v96, 0.0
  %v102 = vld [vmem:[%s2] sm:$0xf]
  %v103 = vld [vmem:[%s2 + $0x4] sm:$0xf]
  %v104 = vld [vmem:[%s2 + $0x8] sm:$0xf]
  %v105 = vld [vmem:[%s2 + $0xc] sm:$0xf]
  %v106 = vld [vmem:[%s2 + $0x10] sm:$0xf]
  %v107 = vld [vmem:[%s2 + $0x14] sm:$0xf]
  %v108 = vld [vmem:[%s2 + $0x18] sm:$0xf]
  %v109 = vld [vmem:[%s2 + $0x1c] sm:$0xf]
  %v110 = vld [vmem:[%s2 + $0x20] sm:$0xf]
  %v111 = vld [vmem:[%s2 + $0x24] sm:$0xf]
  %v112 = vld [vmem:[%s2 + $0x28] sm:$0xf]
  %v113 = vld [vmem:[%s2 + $0x2c] sm:$0xf]
  %v114 = vld [vmem:[%s2 + $0x30] sm:$0xf]
  %v115 = vld [vmem:[%s2 + $0x34] sm:$0xf]
  %v116 = vld [vmem:[%s2 + $0x38] sm:$0xf]
  %v117 = vld [vmem:[%s2 + $0x3c] sm:$0xf]
  %v118 = vld [vmem:[%s2 + $0x40] sm:$0xf]
  %v119 = vld [vmem:[%s2 + $0x44] sm:$0xf]
  %v120 = vld [vmem:[%s2 + $0x48] sm:$0xf]
  %v121 = vld [vmem:[%s2 + $0x4c] sm:$0xf]
  %v122 = vld [vmem:[%s2 + $0x50] sm:$0xf]
  %v123 = vld [vmem:[%s2 + $0x54] sm:$0xf]
  %v124 = vld [vmem:[%s2 + $0x58] sm:$0xf]
  %v125 = vld [vmem:[%s2 + $0x5c] sm:$0xf]
  %v126 = vld [vmem:[%s2 + $0x60] sm:$0xf]
  %v127 = vld [vmem:[%s2 + $0x64] sm:$0xf]
  %v128 = vld [vmem:[%s2 + $0x68] sm:$0xf]
  %v129 = vld [vmem:[%s2 + $0x6c] sm:$0xf]
  %v130 = vld [vmem:[%s2 + $0x70] sm:$0xf]
  %v131 = vld [vmem:[%s2 + $0x74] sm:$0xf]
  %v132 = vld [vmem:[%s2 + $0x78] sm:$0xf]
  %v133 = vld [vmem:[%s2 + $0x7c] sm:$0xf]
  %v134 = vld [vmem:[%s2 + $0x80] sm:$0x1]
  %v135 = vunpack.c.l.bf16 %v134
  %v136 = vpack.c.bf16 %v100, %v98
  %v137 = vpack.c.bf16 %v101, %v99
  %v138 = vlaneseq
  %v139 = vshrl.u32 %v138, 7
  %v140 = vsub.s32 0, %v139
  %v141 = vrot.slane %v135, %v140
  %v174 = vunpack.c.l.b16 %v102
  %v175 = vunpack.c.l.b16 %v103
  %v176 = vunpack.c.l.b16 %v104
  %v177 = vunpack.c.l.b16 %v105
  %v178 = vunpack.c.l.b16 %v106
  %v179 = vunpack.c.l.b16 %v107
  %v180 = vunpack.c.l.b16 %v108
  %v181 = vunpack.c.l.b16 %v109
  %v182 = vunpack.c.l.b16 %v110
  %v183 = vunpack.c.l.b16 %v111
  %v184 = vunpack.c.l.b16 %v112
  %v185 = vunpack.c.l.b16 %v113
  %v186 = vunpack.c.l.b16 %v114
  %v187 = vunpack.c.l.b16 %v115
  %v188 = vunpack.c.l.b16 %v116
  %v189 = vunpack.c.l.b16 %v117
  %v190 = vunpack.c.l.b16 %v118
  %v191 = vunpack.c.l.b16 %v119
  %v192 = vunpack.c.l.b16 %v120
  %v193 = vunpack.c.l.b16 %v121
  %v194 = vunpack.c.l.b16 %v122
  %v195 = vunpack.c.l.b16 %v123
  %v196 = vunpack.c.l.b16 %v124
  %v197 = vunpack.c.l.b16 %v125
  %v198 = vunpack.c.l.b16 %v126
  %v199 = vunpack.c.l.b16 %v127
  %v200 = vunpack.c.l.b16 %v128
  %v201 = vunpack.c.l.b16 %v129
  %v202 = vunpack.c.l.b16 %v130
  %v203 = vunpack.c.l.b16 %v131
  %v204 = vunpack.c.l.b16 %v132
  %v205 = vunpack.c.l.b16 %v133
  %v206 = vpack.c.b16 %v175, %v174
  %v207 = vpack.c.b16 %v177, %v176
  %v208 = vpack.c.b16 %v179, %v178
  %v209 = vpack.c.b16 %v181, %v180
  %v210 = vpack.c.b16 %v183, %v182
  %v211 = vpack.c.b16 %v185, %v184
  %v212 = vpack.c.b16 %v187, %v186
  %v213 = vpack.c.b16 %v189, %v188
  %v214 = vpack.c.b16 %v191, %v190
  %v215 = vpack.c.b16 %v193, %v192
  %v216 = vpack.c.b16 %v195, %v194
  %v217 = vpack.c.b16 %v197, %v196
  %v218 = vpack.c.b16 %v199, %v198
  %v219 = vpack.c.b16 %v201, %v200
  %v220 = vpack.c.b16 %v203, %v202
  %v221 = vpack.c.b16 %v205, %v204
  %238 = vmatprep.subr.bf16.mxu0 0
  %239 = vmatpush1.bf16.msra.mxu0 %v213
  %240 = vmatprep.subr.bf16.mxu0 0
  %241 = vmatpush1.bf16.msra.mxu0 %v212
  %242 = vmatprep.subr.bf16.mxu0 0
  %243 = vmatpush1.bf16.msra.mxu0 %v211
  %244 = vmatprep.subr.bf16.mxu0 0
  %245 = vmatpush1.bf16.msra.mxu0 %v210
  %246 = vmatprep.subr.bf16.mxu0 0
  %247 = vmatpush1.bf16.msra.mxu0 %v209
  %248 = vmatprep.subr.bf16.mxu0 0
  %249 = vmatpush1.bf16.msra.mxu0 %v208
  %250 = vmatprep.subr.bf16.mxu0 0
  %251 = vmatpush1.bf16.msra.mxu0 %v207
  %252 = vmatprep.subr.bf16.mxu0 0
  %253 = vmatpush1.bf16.msra.mxu0 %v206
  %254 = vmatprep.subr.bf16.mxu0 0
  %255 = vmatpush2.bf16.msra.mxu0 %v221
  %256 = vmatprep.subr.bf16.mxu0 0
  %257 = vmatpush2.bf16.msra.mxu0 %v220
  %258 = vmatprep.subr.bf16.mxu0 0
  %259 = vmatpush2.bf16.msra.mxu0 %v219
  %260 = vmatprep.subr.bf16.mxu0 0
  %261 = vmatpush2.bf16.msra.mxu0 %v218
  %262 = vmatprep.subr.bf16.mxu0 0
  %263 = vmatpush2.bf16.msra.mxu0 %v217
  %264 = vmatprep.subr.bf16.mxu0 0
  %265 = vmatpush2.bf16.msra.mxu0 %v216
  %266 = vmatprep.subr.bf16.mxu0 0
  %267 = vmatpush2.bf16.msra.mxu0 %v215
  %268 = vmatprep.subr.bf16.mxu0 0
  %269 = vmatpush2.bf16.msra.mxu0 %v214
  %270 = vmatprep.mubr.bf16.mxu0 %v137
  %271 = vmatmul.mubr.bf16.gmra.mxu0 %v136
  %v272 = vpop.f32.mrf.mxu0
  %v273 = vadd.f32 %v141, %v272
  %v274 = vpop.f32.mrf.mxu0
  %v275 = vpop.f32.mrf.mxu0
  %v276 = vadd.f32 %v141, %v275
  %v277 = vpop.f32.mrf.mxu0
  %278 = vdwg.mxu0
  %v279 = vlaneseq
  %v280 = vand.u32 %v279, 127
  %vm281 = vcmp.lt.s32.totalorder %v280, 4
  %v282 = vsel %vm281, %v273, -inf
  %v283 = vsel %vm281, %v276, -inf
  %vm284 = vcmask 64512
  %v285 = vsel %vm284, %v282, -inf
  %286 = vmax.xlane.f32.xlu0 %v285
  %v287 = vpop.xlane.xlu0 %286
  %v288 = vsel %vm284, %v283, -inf
  %289 = vmax.xlane.f32.xlu0 %v288
  %v290 = vpop.xlane.xlu0 %289
  %v291 = vsub.f32 %v282, %v287
  %v292 = vsub.f32 %v283, %v290
  %v293 = vmul.f32 %v291, 1.442695
  %v294 = vpow.pop %v293
  %v295 = vmul.f32 %v292, 1.442695
  %v296 = vpow.pop %v295
  %v297 = vsel %vm284, %v294, 0.0
  %298 = vadd.xlane.f32.xlu0 %v297
  %v299 = vpop.xlane.xlu0 %298
  %v300 = vsel %vm284, %v296, 0.0
  %301 = vadd.xlane.f32.xlu0 %v300
  %v302 = vpop.xlane.xlu0 %301
  %v303 = vrcp.pop %v299
  %v304 = vmul.f32 %v294, %v303
  %v305 = vrcp.pop %v302
  %v306 = vmul.f32 %v296, %v305
  %vm307 = vcmask 31744
  %308 = vst.msk [vmem:[%s3] sm:$0xff] %vm307, %v304
  %309 = vst.msk [vmem:[%s3 + $0x8] sm:$0xff] %vm307, %v306
  %312 = vrot.lane.b32.xlu0 %v273, 124
  %v313 = vpop.permute.xlu0 %312
  %314 = vrot.lane.b32.xlu0 %v276, 124
  %v315 = vpop.permute.xlu0 %314
  %vm318 = vcmask 7168
  %319 = vst.msk [vmem:[%s4] sm:$0xff] %vm318, %v313
  %320 = vst.msk [vmem:[%s4 + $0x8] sm:$0xff] %vm318, %v315
  // Predicated region
  $region14: #{tpu_custom_call.1} parent=0 // pred_check
    _
  $region15: #{tpu_custom_call.1} parent=0 // pred_check_branch
    %322 = sbr.rel (0) target = $region17
  $region16: #{tpu_custom_call.1} parent=0 // pred_region
    _
  $region17: #{tpu_custom_call.1} parent=0 // pred_fallthru
    _
  // Predicated region
  $region18: #{tpu_custom_call.1} parent=0 // pred_check
    _
  $region19: #{tpu_custom_call.1} parent=0 // pred_check_branch
    %324 = sbr.rel (0) target = $region21
  $region20: #{tpu_custom_call.1} parent=0 // pred_region
    _
  $region21: #{tpu_custom_call.1} parent=0 // pred_fallthru
    _
  // Predicated region
  $region22: #{tpu_custom_call.1} parent=0 // pred_check
    _
  $region23: #{tpu_custom_call.1} parent=0 // pred_check_branch
    %326 = sbr.rel (0) target = $region25
  $region24: #{tpu_custom_call.1} parent=0 // pred_region
    _
  $region25: #{tpu_custom_call.1} parent=0 // pred_fallthru
    _
  // Predicated region
  $region26: #{tpu_custom_call.1} parent=0 // pred_check
    _
  $region27: #{tpu_custom_call.1} parent=0 // pred_check_branch
    %328 = sbr.rel (0) target = $region29
  $region28: #{tpu_custom_call.1} parent=0 // pred_region
    _
  $region29: #{tpu_custom_call.1} parent=0 // pred_fallthru
    _

</llo_original>
